<compile_context>
chip_gen: v5e
topology: v5e:2x2
jax: 0.10.0
libtpu: 0.0.40
codegen_flags: <defaults>
</compile_context>

<pallas_src>
import jax
import jax.numpy as jnp
from jax.experimental import pallas as pl
from jax.experimental.pallas import tpu as pltpu

LN_EPS = 1e-5
LANE = 128
HIDDEN = 256


def _round_up(n, m):
    return ((n + m - 1) // m) * m


def _layernorm(x, gamma, beta):
    # x: [TB, F]; gamma/beta: [1, F].  Biased variance, matching nn.LayerNorm.
    mean = jnp.mean(x, axis=-1, keepdims=True)
    centered = x - mean
    var = jnp.mean(centered * centered, axis=-1, keepdims=True)
    inv = jax.lax.rsqrt(var + LN_EPS)          # EUP: effectively free beside VPU work
    return centered * inv * gamma + beta


def ae_kernel(x_ref,
              w1_ref, b1_ref, g1_ref, be1_ref, w2_ref, b2_ref,
              w3_ref, b3_ref, g3_ref, be3_ref, w4_ref, b4_ref,
              z_ref, xr_ref):
    x = x_ref[...]                              # already f32; no redundant cast

    # ------------------------- encoder -------------------------
    h = jnp.dot(x, w1_ref[...], preferred_element_type=jnp.float32) + b1_ref[...]
    h = _layernorm(h, g1_ref[...], be1_ref[...])
    h = jnp.maximum(h, 0.0)
    z = jnp.dot(h, w2_ref[...], preferred_element_type=jnp.float32) + b2_ref[...]
    z_ref[...] = z.astype(z_ref.dtype)          # lane-dense (padded to 128 cols)

    # ------------------------- decoder -------------------------
    # w3 rows for the padded z columns are zero, so using padded z is exact.
    d = jnp.dot(z, w3_ref[...], preferred_element_type=jnp.float32) + b3_ref[...]
    d = _layernorm(d, g3_ref[...], be3_ref[...])
    d = jnp.maximum(d, 0.0)
    xr = jnp.dot(d, w4_ref[...], preferred_element_type=jnp.float32) + b4_ref[...]
    xr_ref[...] = xr.astype(xr_ref.dtype)       # lane-dense (padded to 128 cols)


def _pick_batch_tile(B, n_genes):
    """Large tiles amortize the ~0.35us per-grid-step overhead; keep >=2 steps
    (megacore on v7x) and stay comfortably inside VMEM on every generation."""
    if B <= 8:
        return B
    bytes_per_row = 4 * (n_genes + 4 * HIDDEN + 2 * LANE)   # x + activations + outputs (f32)
    vmem_budget = 8 * 1024 * 1024                           # headroom even on v7x (64 MiB)
    max_rows = max(8, vmem_budget // (2 * bytes_per_row))   # x2 for double-buffering
    for t in (512, 256, 128, 64, 32, 16, 8):
        if t <= max_rows and B % t == 0 and B // t >= 2:
            return t
    return B


def gdsc_ae_forward(x, params, *, batch_tile=None):
    """x: [B, n_genes] f32. params: weights already transposed to [in, out].
    Returns (z [B, n_latent], x_recon [B, n_genes])."""
    B, n_genes = x.shape
    n_latent = params["w2"].shape[1]

    if batch_tile is None:
        batch_tile = _pick_batch_tile(B, n_genes)
    assert B % batch_tile == 0, "batch must be a multiple of batch_tile"

    # --- lane-dense outputs: pad final-layer columns to a multiple of 128 ---
    n_latent_p = _round_up(n_latent, LANE)
    n_genes_p = _round_up(n_genes, LANE)

    w2, b2 = params["w2"], params["b2"]
    w3 = params["w3"]
    w4, b4 = params["w4"], params["b4"]
    if n_latent_p != n_latent:
        pad = n_latent_p - n_latent
        w2 = jnp.pad(w2, ((0, 0), (0, pad)))    # padded z columns are exactly 0
        b2 = jnp.pad(b2, ((0, 0), (0, pad)))
        w3 = jnp.pad(w3, ((0, pad), (0, 0)))    # zero rows -> padded z cols contribute 0
    if n_genes_p != n_genes:
        pad = n_genes_p - n_genes
        w4 = jnp.pad(w4, ((0, 0), (0, pad)))
        b4 = jnp.pad(b4, ((0, 0), (0, pad)))

    operands = (x,
                params["w1"], params["b1"], params["g1"], params["be1"], w2, b2,
                w3, params["b3"], params["g3"], params["be3"], w4, b4)

    def full(a):
        # Constant block index -> operand stays resident in VMEM across steps.
        return pl.BlockSpec(a.shape, lambda i: (0,) * a.ndim)

    grid_spec = pltpu.PrefetchScalarGridSpec(
        num_scalar_prefetch=0,
        grid=(B // batch_tile,),
        in_specs=[pl.BlockSpec((batch_tile, n_genes), lambda i: (i, 0))]
                 + [full(a) for a in operands[1:]],
        out_specs=[
            pl.BlockSpec((batch_tile, n_latent_p), lambda i: (i, 0)),
            pl.BlockSpec((batch_tile, n_genes_p), lambda i: (i, 0)),
        ],
    )

    z_pad, xr_pad = pl.pallas_call(
        ae_kernel,
        out_shape=(jax.ShapeDtypeStruct((B, n_latent_p), jnp.float32),
                   jax.ShapeDtypeStruct((B, n_genes_p), jnp.float32)),
        grid_spec=grid_spec,
        compiler_params=pltpu.CompilerParams(
            dimension_semantics=("parallel",)),
    )(*operands)

    return z_pad[:, :n_latent], xr_pad[:, :n_genes]


def init_params(key, n_genes, n_latent):
    """Deterministic init mimicking nn.Linear / nn.LayerNorm shapes.
    Weights returned already transposed to [in, out] for `x @ W`."""
    ks = jax.random.split(key, 8)

    def linear(kw, kb, fan_in, fan_out):
        bound = 1.0 / jnp.sqrt(jnp.float32(fan_in))
        w = jax.random.uniform(kw, (fan_in, fan_out), jnp.float32, -bound, bound)
        b = jax.random.uniform(kb, (1, fan_out), jnp.float32, -bound, bound)
        return w, b

    w1, b1 = linear(ks[0], ks[1], n_genes, HIDDEN)
    w2, b2 = linear(ks[2], ks[3], HIDDEN, n_latent)
    w3, b3 = linear(ks[4], ks[5], n_latent, HIDDEN)
    w4, b4 = linear(ks[6], ks[7], HIDDEN, n_genes)

    ones = jnp.ones((1, HIDDEN), jnp.float32)
    zeros = jnp.zeros((1, HIDDEN), jnp.float32)
    return dict(
        w1=w1, b1=b1, g1=ones, be1=zeros,
        w2=w2, b2=b2,
        w3=w3, b3=b3, g3=ones, be3=zeros,
        w4=w4, b4=b4,
    )


def _reference(x, p):
    def ln(h, g, be):
        mu = h.mean(-1, keepdims=True)
        c = h - mu
        return c * jax.lax.rsqrt((c * c).mean(-1, keepdims=True) + LN_EPS) * g + be

    h = x @ p["w1"] + p["b1"]
    h = jnp.maximum(ln(h, p["g1"], p["be1"]), 0.0)
    z = h @ p["w2"] + p["b2"]
    d = z @ p["w3"] + p["b3"]
    d = jnp.maximum(ln(d, p["g3"], p["be3"]), 0.0)
    xr = d @ p["w4"] + p["b4"]
    return z, xr


if __name__ == "__main__":
    n_genes, n_latent, batch = 64, 32, 16   # small demo shapes (n_classes unused by forward)

    key = jax.random.PRNGKey(0)
    kx, kp = jax.random.split(key)
    x = jax.random.normal(kx, (batch, n_genes), jnp.float32)
    params = init_params(kp, n_genes, n_latent)

    z, x_recon = gdsc_ae_forward(x, params)
    z = jax.block_until_ready(z)
    x_recon = jax.block_until_ready(x_recon)

    z_ref, xr_ref = _reference(x, params)
    assert z.shape == (batch, n_latent)
    assert x_recon.shape == (batch, n_genes)
    assert jnp.allclose(z, z_ref, atol=1e-4, rtol=1e-4), "z mismatch vs reference"
    assert jnp.allclose(x_recon, xr_ref, atol=1e-4, rtol=1e-4), "x_recon mismatch vs reference"

    print("KERNEL_OK")
</pallas_src>

<mosaic_0001>
module attributes {stable_mosaic.version = 11 : i64} {
  func.func @ae_kernel(%arg0: i32, %arg1: memref<8x64xf32, #tpu.memory_space<vmem>>, %arg2: memref<64x256xf32, #tpu.memory_space<vmem>>, %arg3: memref<1x256xf32, #tpu.memory_space<vmem>>, %arg4: memref<1x256xf32, #tpu.memory_space<vmem>>, %arg5: memref<1x256xf32, #tpu.memory_space<vmem>>, %arg6: memref<256x128xf32, #tpu.memory_space<vmem>>, %arg7: memref<1x128xf32, #tpu.memory_space<vmem>>, %arg8: memref<128x256xf32, #tpu.memory_space<vmem>>, %arg9: memref<1x256xf32, #tpu.memory_space<vmem>>, %arg10: memref<1x256xf32, #tpu.memory_space<vmem>>, %arg11: memref<1x256xf32, #tpu.memory_space<vmem>>, %arg12: memref<256x128xf32, #tpu.memory_space<vmem>>, %arg13: memref<1x128xf32, #tpu.memory_space<vmem>>, %arg14: memref<8x128xf32, #tpu.memory_space<vmem>>, %arg15: memref<8x128xf32, #tpu.memory_space<vmem>>) attributes {dimension_semantics = [#tpu.dimension_semantics<parallel>], iteration_bounds = array<i64: 2>, scalar_prefetch = 0 : i64, scratch_operands = 0 : i64, tpu.core_type = #tpu.core_type<tc>, window_params = [{transform_indices = @transform_0, window_bounds = array<i64: 8, 64>}, {pipeline_mode = #tpu.pipeline_mode<synchronous>, transform_indices = @transform_1, window_bounds = array<i64: 64, 256>}, {pipeline_mode = #tpu.pipeline_mode<synchronous>, transform_indices = @transform_2, window_bounds = array<i64: 1, 256>}, {pipeline_mode = #tpu.pipeline_mode<synchronous>, transform_indices = @transform_3, window_bounds = array<i64: 1, 256>}, {pipeline_mode = #tpu.pipeline_mode<synchronous>, transform_indices = @transform_4, window_bounds = array<i64: 1, 256>}, {pipeline_mode = #tpu.pipeline_mode<synchronous>, transform_indices = @transform_5, window_bounds = array<i64: 256, 128>}, {pipeline_mode = #tpu.pipeline_mode<synchronous>, transform_indices = @transform_6, window_bounds = array<i64: 1, 128>}, {pipeline_mode = #tpu.pipeline_mode<synchronous>, transform_indices = @transform_7, window_bounds = array<i64: 128, 256>}, {pipeline_mode = #tpu.pipeline_mode<synchronous>, transform_indices = @transform_8, window_bounds = array<i64: 1, 256>}, {pipeline_mode = #tpu.pipeline_mode<synchronous>, transform_indices = @transform_9, window_bounds = array<i64: 1, 256>}, {pipeline_mode = #tpu.pipeline_mode<synchronous>, transform_indices = @transform_10, window_bounds = array<i64: 1, 256>}, {pipeline_mode = #tpu.pipeline_mode<synchronous>, transform_indices = @transform_11, window_bounds = array<i64: 256, 128>}, {pipeline_mode = #tpu.pipeline_mode<synchronous>, transform_indices = @transform_12, window_bounds = array<i64: 1, 128>}, {transform_indices = @transform_13, window_bounds = array<i64: 8, 128>}, {transform_indices = @transform_14, window_bounds = array<i64: 8, 128>}]} {
    %c0 = arith.constant 0 : index
    %c0_0 = arith.constant 0 : index
    %0 = vector.load %arg1[%c0, %c0_0] : memref<8x64xf32, #tpu.memory_space<vmem>>, vector<8x64xf32>
    %c0_1 = arith.constant 0 : index
    %c0_2 = arith.constant 0 : index
    %1 = vector.load %arg2[%c0_1, %c0_2] : memref<64x256xf32, #tpu.memory_space<vmem>>, vector<64x256xf32>
    %cst = arith.constant dense<0.000000e+00> : vector<8x256xf32>
    %2 = tpu.matmul %0, %1, %cst {dimension_numbers = #tpu.dot_dimension_numbers<[1], [0], [0], [1], [0, 0, 1, 1], [], []>} : vector<8x64xf32>, vector<64x256xf32>, vector<8x256xf32> -> vector<8x256xf32>
    %c0_3 = arith.constant 0 : index
    %c0_4 = arith.constant 0 : index
    %3 = vector.load %arg3[%c0_3, %c0_4] : memref<1x256xf32, #tpu.memory_space<vmem>>, vector<1x256xf32>
    %4 = vector.broadcast %3 : vector<1x256xf32> to vector<8x256xf32>
    %5 = arith.addf %2, %4 : vector<8x256xf32>
    %c0_5 = arith.constant 0 : index
    %c0_6 = arith.constant 0 : index
    %6 = vector.load %arg4[%c0_5, %c0_6] : memref<1x256xf32, #tpu.memory_space<vmem>>, vector<1x256xf32>
    %c0_7 = arith.constant 0 : index
    %c0_8 = arith.constant 0 : index
    %7 = vector.load %arg5[%c0_7, %c0_8] : memref<1x256xf32, #tpu.memory_space<vmem>>, vector<1x256xf32>
    %cst_9 = arith.constant dense<0.000000e+00> : vector<8xf32>
    %8 = vector.multi_reduction <add>, %5, %cst_9 [1] : vector<8x256xf32> to vector<8xf32>
    %9 = vector.shape_cast %8 : vector<8xf32> to vector<8x1xf32>
    %cst_10 = arith.constant 2.560000e+02 : f32
    %10 = vector.broadcast %cst_10 : f32 to vector<8x1xf32>
    %11 = arith.divf %9, %10 : vector<8x1xf32>
    %12 = vector.broadcast %11 : vector<8x1xf32> to vector<8x256xf32>
    %13 = arith.subf %5, %12 : vector<8x256xf32>
    %14 = arith.mulf %13, %13 : vector<8x256xf32>
    %cst_11 = arith.constant dense<0.000000e+00> : vector<8xf32>
    %15 = vector.multi_reduction <add>, %14, %cst_11 [1] : vector<8x256xf32> to vector<8xf32>
    %16 = vector.shape_cast %15 : vector<8xf32> to vector<8x1xf32>
    %cst_12 = arith.constant 2.560000e+02 : f32
    %17 = vector.broadcast %cst_12 : f32 to vector<8x1xf32>
    %18 = arith.divf %16, %17 : vector<8x1xf32>
    %cst_13 = arith.constant 9.99999974E-6 : f32
    %19 = vector.broadcast %cst_13 : f32 to vector<8x1xf32>
    %20 = arith.addf %18, %19 : vector<8x1xf32>
    %21 = math.rsqrt %20 : vector<8x1xf32>
    %22 = vector.broadcast %21 : vector<8x1xf32> to vector<8x256xf32>
    %23 = arith.mulf %13, %22 : vector<8x256xf32>
    %24 = vector.broadcast %6 : vector<1x256xf32> to vector<8x256xf32>
    %25 = arith.mulf %23, %24 : vector<8x256xf32>
    %26 = vector.broadcast %7 : vector<1x256xf32> to vector<8x256xf32>
    %27 = arith.addf %25, %26 : vector<8x256xf32>
    %cst_14 = arith.constant 0.000000e+00 : f32
    %28 = vector.broadcast %cst_14 : f32 to vector<8x256xf32>
    %29 = arith.maximumf %27, %28 : vector<8x256xf32>
    %c0_15 = arith.constant 0 : index
    %c0_16 = arith.constant 0 : index
    %30 = vector.load %arg6[%c0_15, %c0_16] : memref<256x128xf32, #tpu.memory_space<vmem>>, vector<256x128xf32>
    %cst_17 = arith.constant dense<0.000000e+00> : vector<8x128xf32>
    %31 = tpu.matmul %29, %30, %cst_17 {dimension_numbers = #tpu.dot_dimension_numbers<[1], [0], [0], [1], [0, 0, 1, 1], [], []>} : vector<8x256xf32>, vector<256x128xf32>, vector<8x128xf32> -> vector<8x128xf32>
    %c0_18 = arith.constant 0 : index
    %c0_19 = arith.constant 0 : index
    %32 = vector.load %arg7[%c0_18, %c0_19] : memref<1x128xf32, #tpu.memory_space<vmem>>, vector<1x128xf32>
    %33 = vector.broadcast %32 : vector<1x128xf32> to vector<8x128xf32>
    %34 = arith.addf %31, %33 : vector<8x128xf32>
    %c0_20 = arith.constant 0 : index
    %c0_21 = arith.constant 0 : index
    %35 = vector.load %arg14[%c0_20, %c0_21] : memref<8x128xf32, #tpu.memory_space<vmem>>, vector<8x128xf32>
    tpu.vector_store %arg14[%c0_20, %c0_21], %34 {strides = array<i32>} : memref<8x128xf32, #tpu.memory_space<vmem>>, vector<8x128xf32>,
    %c0_22 = arith.constant 0 : index
    %c0_23 = arith.constant 0 : index
    %36 = vector.load %arg8[%c0_22, %c0_23] : memref<128x256xf32, #tpu.memory_space<vmem>>, vector<128x256xf32>
    %cst_24 = arith.constant dense<0.000000e+00> : vector<8x256xf32>
    %37 = tpu.matmul %34, %36, %cst_24 {dimension_numbers = #tpu.dot_dimension_numbers<[1], [0], [0], [1], [0, 0, 1, 1], [], []>} : vector<8x128xf32>, vector<128x256xf32>, vector<8x256xf32> -> vector<8x256xf32>
    %c0_25 = arith.constant 0 : index
    %c0_26 = arith.constant 0 : index
    %38 = vector.load %arg9[%c0_25, %c0_26] : memref<1x256xf32, #tpu.memory_space<vmem>>, vector<1x256xf32>
    %39 = vector.broadcast %38 : vector<1x256xf32> to vector<8x256xf32>
    %40 = arith.addf %37, %39 : vector<8x256xf32>
    %c0_27 = arith.constant 0 : index
    %c0_28 = arith.constant 0 : index
    %41 = vector.load %arg10[%c0_27, %c0_28] : memref<1x256xf32, #tpu.memory_space<vmem>>, vector<1x256xf32>
    %c0_29 = arith.constant 0 : index
    %c0_30 = arith.constant 0 : index
    %42 = vector.load %arg11[%c0_29, %c0_30] : memref<1x256xf32, #tpu.memory_space<vmem>>, vector<1x256xf32>
    %cst_31 = arith.constant dense<0.000000e+00> : vector<8xf32>
    %43 = vector.multi_reduction <add>, %40, %cst_31 [1] : vector<8x256xf32> to vector<8xf32>
    %44 = vector.shape_cast %43 : vector<8xf32> to vector<8x1xf32>
    %cst_32 = arith.constant 2.560000e+02 : f32
    %45 = vector.broadcast %cst_32 : f32 to vector<8x1xf32>
    %46 = arith.divf %44, %45 : vector<8x1xf32>
    %47 = vector.broadcast %46 : vector<8x1xf32> to vector<8x256xf32>
    %48 = arith.subf %40, %47 : vector<8x256xf32>
    %49 = arith.mulf %48, %48 : vector<8x256xf32>
    %cst_33 = arith.constant dense<0.000000e+00> : vector<8xf32>
    %50 = vector.multi_reduction <add>, %49, %cst_33 [1] : vector<8x256xf32> to vector<8xf32>
    %51 = vector.shape_cast %50 : vector<8xf32> to vector<8x1xf32>
    %cst_34 = arith.constant 2.560000e+02 : f32
    %52 = vector.broadcast %cst_34 : f32 to vector<8x1xf32>
    %53 = arith.divf %51, %52 : vector<8x1xf32>
    %cst_35 = arith.constant 9.99999974E-6 : f32
    %54 = vector.broadcast %cst_35 : f32 to vector<8x1xf32>
    %55 = arith.addf %53, %54 : vector<8x1xf32>
    %56 = math.rsqrt %55 : vector<8x1xf32>
    %57 = vector.broadcast %56 : vector<8x1xf32> to vector<8x256xf32>
    %58 = arith.mulf %48, %57 : vector<8x256xf32>
    %59 = vector.broadcast %41 : vector<1x256xf32> to vector<8x256xf32>
    %60 = arith.mulf %58, %59 : vector<8x256xf32>
    %61 = vector.broadcast %42 : vector<1x256xf32> to vector<8x256xf32>
    %62 = arith.addf %60, %61 : vector<8x256xf32>
    %cst_36 = arith.constant 0.000000e+00 : f32
    %63 = vector.broadcast %cst_36 : f32 to vector<8x256xf32>
    %64 = arith.maximumf %62, %63 : vector<8x256xf32>
    %c0_37 = arith.constant 0 : index
    %c0_38 = arith.constant 0 : index
    %65 = vector.load %arg12[%c0_37, %c0_38] : memref<256x128xf32, #tpu.memory_space<vmem>>, vector<256x128xf32>
    %cst_39 = arith.constant dense<0.000000e+00> : vector<8x128xf32>
    %66 = tpu.matmul %64, %65, %cst_39 {dimension_numbers = #tpu.dot_dimension_numbers<[1], [0], [0], [1], [0, 0, 1, 1], [], []>} : vector<8x256xf32>, vector<256x128xf32>, vector<8x128xf32> -> vector<8x128xf32>
    %c0_40 = arith.constant 0 : index
    %c0_41 = arith.constant 0 : index
    %67 = vector.load %arg13[%c0_40, %c0_41] : memref<1x128xf32, #tpu.memory_space<vmem>>, vector<1x128xf32>
    %68 = vector.broadcast %67 : vector<1x128xf32> to vector<8x128xf32>
    %69 = arith.addf %66, %68 : vector<8x128xf32>
    %c0_42 = arith.constant 0 : index
    %c0_43 = arith.constant 0 : index
    %70 = vector.load %arg15[%c0_42, %c0_43] : memref<8x128xf32, #tpu.memory_space<vmem>>, vector<8x128xf32>
    tpu.vector_store %arg15[%c0_42, %c0_43], %69 {strides = array<i32>} : memref<8x128xf32, #tpu.memory_space<vmem>>, vector<8x128xf32>,
    return
  }
  func.func @transform_0(%arg0: i32) -> (i32, i32) {
    %c0_i32 = arith.constant 0 : i32
    %c0_i32_0 = arith.constant 0 : i32
    return %arg0, %c0_i32 : i32, i32
  }
  func.func @transform_1(%arg0: i32) -> (i32, i32) {
    %c0_i32 = arith.constant 0 : i32
    %c0_i32_0 = arith.constant 0 : i32
    %c0_i32_1 = arith.constant 0 : i32
    return %c0_i32, %c0_i32_0 : i32, i32
  }
  func.func @transform_2(%arg0: i32) -> (i32, i32) {
    %c0_i32 = arith.constant 0 : i32
    %c0_i32_0 = arith.constant 0 : i32
    %c0_i32_1 = arith.constant 0 : i32
    return %c0_i32, %c0_i32_0 : i32, i32
  }
  func.func @transform_3(%arg0: i32) -> (i32, i32) {
    %c0_i32 = arith.constant 0 : i32
    %c0_i32_0 = arith.constant 0 : i32
    %c0_i32_1 = arith.constant 0 : i32
    return %c0_i32, %c0_i32_0 : i32, i32
  }
  func.func @transform_4(%arg0: i32) -> (i32, i32) {
    %c0_i32 = arith.constant 0 : i32
    %c0_i32_0 = arith.constant 0 : i32
    %c0_i32_1 = arith.constant 0 : i32
    return %c0_i32, %c0_i32_0 : i32, i32
  }
  func.func @transform_5(%arg0: i32) -> (i32, i32) {
    %c0_i32 = arith.constant 0 : i32
    %c0_i32_0 = arith.constant 0 : i32
    %c0_i32_1 = arith.constant 0 : i32
    return %c0_i32, %c0_i32_0 : i32, i32
  }
  func.func @transform_6(%arg0: i32) -> (i32, i32) {
    %c0_i32 = arith.constant 0 : i32
    %c0_i32_0 = arith.constant 0 : i32
    %c0_i32_1 = arith.constant 0 : i32
    return %c0_i32, %c0_i32_0 : i32, i32
  }
  func.func @transform_7(%arg0: i32) -> (i32, i32) {
    %c0_i32 = arith.constant 0 : i32
    %c0_i32_0 = arith.constant 0 : i32
    %c0_i32_1 = arith.constant 0 : i32
    return %c0_i32, %c0_i32_0 : i32, i32
  }
  func.func @transform_8(%arg0: i32) -> (i32, i32) {
    %c0_i32 = arith.constant 0 : i32
    %c0_i32_0 = arith.constant 0 : i32
    %c0_i32_1 = arith.constant 0 : i32
    return %c0_i32, %c0_i32_0 : i32, i32
  }
  func.func @transform_9(%arg0: i32) -> (i32, i32) {
    %c0_i32 = arith.constant 0 : i32
    %c0_i32_0 = arith.constant 0 : i32
    %c0_i32_1 = arith.constant 0 : i32
    return %c0_i32, %c0_i32_0 : i32, i32
  }
  func.func @transform_10(%arg0: i32) -> (i32, i32) {
    %c0_i32 = arith.constant 0 : i32
    %c0_i32_0 = arith.constant 0 : i32
    %c0_i32_1 = arith.constant 0 : i32
    return %c0_i32, %c0_i32_0 : i32, i32
  }
  func.func @transform_11(%arg0: i32) -> (i32, i32) {
    %c0_i32 = arith.constant 0 : i32
    %c0_i32_0 = arith.constant 0 : i32
    %c0_i32_1 = arith.constant 0 : i32
    return %c0_i32, %c0_i32_0 : i32, i32
  }
  func.func @transform_12(%arg0: i32) -> (i32, i32) {
    %c0_i32 = arith.constant 0 : i32
    %c0_i32_0 = arith.constant 0 : i32
    %c0_i32_1 = arith.constant 0 : i32
    return %c0_i32, %c0_i32_0 : i32, i32
  }
  func.func @transform_13(%arg0: i32) -> (i32, i32) {
    %c0_i32 = arith.constant 0 : i32
    %c0_i32_0 = arith.constant 0 : i32
    return %arg0, %c0_i32 : i32, i32
  }
  func.func @transform_14(%arg0: i32) -> (i32, i32) {
    %c0_i32 = arith.constant 0 : i32
    %c0_i32_0 = arith.constant 0 : i32
    return %arg0, %c0_i32 : i32, i32
  }
}

</mosaic_0001>

<llo_original>
// kernel: tpu_custom_call.1
$region0: #{tpu_custom_call.1}
  #allocation0 [shape = 'u32[]', space=smem, size = 0x4, offset = 0x4, fixed_abs, tag = 'smem constant byte address 0x4 - core index']
  #allocation1 [shape = 'u32[72,128]{1,0:T(1,128)}', space=vmem, size = 0x9000, scoped, tag = 'internal scratch']
  %s0 = inlined_call_operand.hbm [shape: f32[16,64], index: 0, kind: input, shape index: {}]
  %s1 = inlined_call_operand.hbm [shape: f32[64,256], index: 1, kind: input, shape index: {}]
  %s2 = inlined_call_operand.hbm [shape: f32[1,256], index: 2, kind: input, shape index: {}]
  %s3 = inlined_call_operand.vmem [shape: f32[1,256], index: 3, kind: input, shape index: {}]
  %s4 = inlined_call_operand.hbm [shape: f32[1,256], index: 4, kind: input, shape index: {}]
  %s5 = inlined_call_operand.hbm [shape: f32[256,128], index: 5, kind: input, shape index: {}]
  %s6 = inlined_call_operand.hbm [shape: f32[1,128], index: 6, kind: input, shape index: {}]
  %s7 = inlined_call_operand.hbm [shape: f32[128,256], index: 7, kind: input, shape index: {}]
  %s8 = inlined_call_operand.vmem [shape: f32[1,256], index: 8, kind: input, shape index: {}]
  %s9 = inlined_call_operand.vmem [shape: f32[1,256], index: 9, kind: input, shape index: {}]
  %s10 = inlined_call_operand.vmem [shape: f32[1,256], index: 10, kind: input, shape index: {}]
  %s11 = inlined_call_operand.hbm [shape: f32[256,128], index: 11, kind: input, shape index: {}]
  %s12 = inlined_call_operand.vmem [shape: f32[1,128], index: 12, kind: input, shape index: {}]
  %s13 = inlined_call_operand.hbm [shape: f32[16,128], index: 13, kind: output, shape index: {0}]
  %s14 = inlined_call_operand.hbm [shape: f32[16,128], index: 14, kind: output, shape index: {1}]
  %15 = xla_tuple %s13, %s14
  %s16 = sld [smem:[#allocation0]]
  $region125: #{tpu_custom_call.1} parent=0
    _
  %s18 = ssub.s32 1, %s16
  %s19 = scalar_select 0, %s18, %s16
  $region1: #{tpu_custom_call.1} parent=0
    #allocation2 [shape = 'u8[8192]{0}', space=vmem, size = 0x2000, scoped, tag = 'input window, operand 0']
    #allocation3 [shape = 's32[2]{0}', space=sflag, size = 0x8, scoped, tag = 'scoped memory for tpu_custom_call.1']
    #allocation4 [shape = 's32[2]{0}', space=sflag, size = 0x8, scoped, tag = 'scoped memory for tpu_custom_call.1']
    #allocation5 [shape = 'u8[65536]{0}', space=vmem, size = 0x10000, scoped, tag = 'input window, operand 1, single buffered']
    #allocation6 [shape = 's32[1]{0}', space=sflag, size = 0x4, scoped, tag = 'scoped memory for tpu_custom_call.1']
    #allocation7 [shape = 'u8[1024]{0}', space=vmem, size = 0x400, scoped, tag = 'input window, operand 2, single buffered']
    #allocation8 [shape = 'u8[1024]{0}', space=vmem, size = 0x400, scoped, tag = 'input window, operand 4, single buffered']
    #allocation9 [shape = 's32[1]{0}', space=sflag, size = 0x4, scoped, tag = 'scoped memory for tpu_custom_call.1']
    #allocation10 [shape = 'u8[131072]{0}', space=vmem, size = 0x20000, scoped, tag = 'input window, operand 5, single buffered']
    #allocation11 [shape = 'u8[512]{0}', space=vmem, size = 0x400, scoped, tag = 'input window, operand 6, single buffered']
    #allocation12 [shape = 's32[1]{0}', space=sflag, size = 0x4, scoped, tag = 'scoped memory for tpu_custom_call.1']
    #allocation13 [shape = 'u8[131072]{0}', space=vmem, size = 0x20000, scoped, tag = 'input window, operand 7, single buffered']
    #allocation14 [shape = 'u8[131072]{0}', space=vmem, size = 0x20000, scoped, tag = 'input window, operand 11, single buffered']
    #allocation15 [shape = 's32[1]{0}', space=sflag, size = 0x4, scoped, tag = 'scoped memory for tpu_custom_call.1']
    #allocation16 [shape = 'u8[8192]{0}', space=vmem, size = 0x2000, scoped, tag = 'output window, operand 0']
    #allocation17 [shape = 'u8[8192]{0}', space=vmem, size = 0x2000, scoped, tag = 'output window, operand 1']
    #allocation18 [shape = 's32[2]{0}', space=sflag, size = 0x8, scoped, tag = 'scoped memory for tpu_custom_call.1']
    %20 = vsyncpa [#allocation3], 0
    %s21 = scalar_lea.sflag [#allocation3], 1
    %22 = vsyncpa %s21, 0
    %23 = vsyncpa [#allocation6], 0
    %24 = vsyncpa [#allocation9], 0
    %25 = vsyncpa [#allocation12], 0
    %26 = vsyncpa [#allocation15], 0
    %27 = vsyncpa [#allocation4], 0
    %s28 = scalar_lea.sflag [#allocation4], 1
    %29 = vsyncpa %s28, 0
    %30 = vsyncpa [#allocation18], 0
    %s31 = scalar_lea.sflag [#allocation18], 1
    %32 = vsyncpa %s31, 0
    loop: start=0, step=1, limit=4
    $region2: #{tpu_custom_call.1} parent=1 // loop_pre_header
      _
    $region3: #{tpu_custom_call.1} parent=1 // loop_header
      %s34 = sphi 0, %s38
      %p35 = scmp.ge.s32.totalorder %s34, 4
      %s44 = sphi 0, %s46
      %s47 = sphi 0, %s44
      %s48 = sphi 0, %s47
      %s64 = sphi 0, %s48
      %s68 = sphi 0, %s68
      %s70 = sphi 0, %s68
      %s71 = sphi 0, %s70
      %s85 = sphi 0, %s71
      %s89 = sphi 0, %s89
      %s91 = sphi 0, %s89
      %s92 = sphi 0, %s91
      %s106 = sphi 0, %s92
      %s110 = sphi 0, %s110
      %s112 = sphi 0, %s110
      %s113 = sphi 0, %s112
      %s127 = sphi 0, %s113
      %s131 = sphi 0, %s131
      %s133 = sphi 0, %s131
      %s134 = sphi 0, %s133
      %s148 = sphi 0, %s134
      %s152 = sphi 0, %s152
      %s154 = sphi 0, %s152
      %s155 = sphi 0, %s154
      %s169 = sphi 0, %s155
      %s173 = sphi 0, %s173
      %s175 = sphi 0, %s173
      %s176 = sphi 0, %s175
      %s190 = sphi 0, %s176
      %s194 = sphi 0, %s194
      %s196 = sphi 0, %s194
      %s197 = sphi 0, %s196
      %s211 = sphi 0, %s197
      %s215 = sphi 0, %s215
      %s217 = sphi 0, %s215
      %s218 = sphi 0, %s217
      %s232 = sphi 0, %s218
      %s236 = sphi 0, %s236
      %s238 = sphi 0, %s236
      %s239 = sphi 0, %s238
      %s253 = sphi 0, %s239
      %s257 = sphi 0, %s257
      %s259 = sphi 0, %s257
      %s260 = sphi 0, %s259
      %s274 = sphi 0, %s260
      %s278 = sphi 0, %s278
      %s280 = sphi 0, %s278
      %s281 = sphi 0, %s280
      %s295 = sphi 0, %s281
      %s299 = sphi 0, %s299
      %s301 = sphi 0, %s299
      %s302 = sphi 0, %s301
      %s316 = sphi 0, %s302
      %s322 = sphi 0, %s324
      %s325 = sphi 0, %s322
      %s326 = sphi 0, %s325
      %s342 = sphi 0, %s326
      %s348 = sphi 0, %s350
      %s351 = sphi 0, %s348
      %s352 = sphi 0, %s351
      %s368 = sphi 0, %s352
    $region4: #{tpu_custom_call.1} parent=1 // loop_header_branch
      %37 = sbr.rel (%p35) target = $region8
    $region5: #{tpu_custom_call.1} parent=1 // loop_body
      %s39 = ssub.s32 %s34, 1
      %s40 = ssub.s32 %s34, 2
      %s41 = sadd.s32 %s34, 1
      %s42 = ssub.s32 %s34, %s41
      %p43 = scmp.eq.s32.totalorder %s42, 0
      %s45 = sadd.s32 %s44, 1
      %s46 = scalar_select %p43, %s44, %s45
      %p49 = pneg %p43
      %p50 = scmp.eq.s32.totalorder %s34, 1
      %p51 = por %p49, %p50
      %p52 = scmp.ne.s32.totalorder %s44, %s47
      %p53 = scmp.eq.s32.totalorder %s34, 0
      %p54 = por %p52, %p53
      %p55 = scmp.ne.s32.totalorder %s44, %s47
      %p56 = scmp.eq.s32.totalorder %s39, 1
      %p57 = por %p55, %p56
      %p58 = scmp.ne.s32.totalorder %s47, %s48
      %p59 = scmp.eq.s32.totalorder %s39, 0
      %p60 = por %p58, %p59
      %p61 = scmp.ne.s32.totalorder %s47, %s48
      %p62 = scmp.eq.s32.totalorder %s40, 1
      %p63 = por %p61, %p62
      %p65 = scmp.ne.s32.totalorder %s48, %s64
      %p66 = scmp.eq.s32.totalorder %s40, 0
      %p67 = por %p65, %p66
      %s69 = sadd.s32 %s68, 1
      %p72 = scmp.eq.s32.totalorder %s34, 1
      %p73 = scmp.ne.s32.totalorder %s68, %s70
      %p74 = scmp.eq.s32.totalorder %s34, 0
      %p75 = por %p73, %p74
      %p76 = scmp.ne.s32.totalorder %s68, %s70
      %p77 = scmp.eq.s32.totalorder %s39, 1
      %p78 = por %p76, %p77
      %p79 = scmp.ne.s32.totalorder %s70, %s71
      %p80 = scmp.eq.s32.totalorder %s39, 0
      %p81 = por %p79, %p80
      %p82 = scmp.ne.s32.totalorder %s70, %s71
      %p83 = scmp.eq.s32.totalorder %s40, 1
      %p84 = por %p82, %p83
      %p86 = scmp.ne.s32.totalorder %s71, %s85
      %p87 = scmp.eq.s32.totalorder %s40, 0
      %p88 = por %p86, %p87
      %s90 = sadd.s32 %s89, 1
      %p93 = scmp.eq.s32.totalorder %s34, 1
      %p94 = scmp.ne.s32.totalorder %s89, %s91
      %p95 = scmp.eq.s32.totalorder %s34, 0
      %p96 = por %p94, %p95
      %p97 = scmp.ne.s32.totalorder %s89, %s91
      %p98 = scmp.eq.s32.totalorder %s39, 1
      %p99 = por %p97, %p98
      %p100 = scmp.ne.s32.totalorder %s91, %s92
      %p101 = scmp.eq.s32.totalorder %s39, 0
      %p102 = por %p100, %p101
      %p103 = scmp.ne.s32.totalorder %s91, %s92
      %p104 = scmp.eq.s32.totalorder %s40, 1
      %p105 = por %p103, %p104
      %p107 = scmp.ne.s32.totalorder %s92, %s106
      %p108 = scmp.eq.s32.totalorder %s40, 0
      %p109 = por %p107, %p108
      %s111 = sadd.s32 %s110, 1
      %p114 = scmp.eq.s32.totalorder %s34, 1
      %p115 = scmp.ne.s32.totalorder %s110, %s112
      %p116 = scmp.eq.s32.totalorder %s34, 0
      %p117 = por %p115, %p116
      %p118 = scmp.ne.s32.totalorder %s110, %s112
      %p119 = scmp.eq.s32.totalorder %s39, 1
      %p120 = por %p118, %p119
      %p121 = scmp.ne.s32.totalorder %s112, %s113
      %p122 = scmp.eq.s32.totalorder %s39, 0
      %p123 = por %p121, %p122
      %p124 = scmp.ne.s32.totalorder %s112, %s113
      %p125 = scmp.eq.s32.totalorder %s40, 1
      %p126 = por %p124, %p125
      %p128 = scmp.ne.s32.totalorder %s113, %s127
      %p129 = scmp.eq.s32.totalorder %s40, 0
      %p130 = por %p128, %p129
      %s132 = sadd.s32 %s131, 1
      %p135 = scmp.eq.s32.totalorder %s34, 1
      %p136 = scmp.ne.s32.totalorder %s131, %s133
      %p137 = scmp.eq.s32.totalorder %s34, 0
      %p138 = por %p136, %p137
      %p139 = scmp.ne.s32.totalorder %s131, %s133
      %p140 = scmp.eq.s32.totalorder %s39, 1
      %p141 = por %p139, %p140
      %p142 = scmp.ne.s32.totalorder %s133, %s134
      %p143 = scmp.eq.s32.totalorder %s39, 0
      %p144 = por %p142, %p143
      %p145 = scmp.ne.s32.totalorder %s133, %s134
      %p146 = scmp.eq.s32.totalorder %s40, 1
      %p147 = por %p145, %p146
      %p149 = scmp.ne.s32.totalorder %s134, %s148
      %p150 = scmp.eq.s32.totalorder %s40, 0
      %p151 = por %p149, %p150
      %s153 = sadd.s32 %s152, 1
      %p156 = scmp.eq.s32.totalorder %s34, 1
      %p157 = scmp.ne.s32.totalorder %s152, %s154
      %p158 = scmp.eq.s32.totalorder %s34, 0
      %p159 = por %p157, %p158
      %p160 = scmp.ne.s32.totalorder %s152, %s154
      %p161 = scmp.eq.s32.totalorder %s39, 1
      %p162 = por %p160, %p161
      %p163 = scmp.ne.s32.totalorder %s154, %s155
      %p164 = scmp.eq.s32.totalorder %s39, 0
      %p165 = por %p163, %p164
      %p166 = scmp.ne.s32.totalorder %s154, %s155
      %p167 = scmp.eq.s32.totalorder %s40, 1
      %p168 = por %p166, %p167
      %p170 = scmp.ne.s32.totalorder %s155, %s169
      %p171 = scmp.eq.s32.totalorder %s40, 0
      %p172 = por %p170, %p171
      %s174 = sadd.s32 %s173, 1
      %p177 = scmp.eq.s32.totalorder %s34, 1
      %p178 = scmp.ne.s32.totalorder %s173, %s175
      %p179 = scmp.eq.s32.totalorder %s34, 0
      %p180 = por %p178, %p179
      %p181 = scmp.ne.s32.totalorder %s173, %s175
      %p182 = scmp.eq.s32.totalorder %s39, 1
      %p183 = por %p181, %p182
      %p184 = scmp.ne.s32.totalorder %s175, %s176
      %p185 = scmp.eq.s32.totalorder %s39, 0
      %p186 = por %p184, %p185
      %p187 = scmp.ne.s32.totalorder %s175, %s176
      %p188 = scmp.eq.s32.totalorder %s40, 1
      %p189 = por %p187, %p188
      %p191 = scmp.ne.s32.totalorder %s176, %s190
      %p192 = scmp.eq.s32.totalorder %s40, 0
      %p193 = por %p191, %p192
      %s195 = sadd.s32 %s194, 1
      %p198 = scmp.eq.s32.totalorder %s34, 1
      %p199 = scmp.ne.s32.totalorder %s194, %s196
      %p200 = scmp.eq.s32.totalorder %s34, 0
      %p201 = por %p199, %p200
      %p202 = scmp.ne.s32.totalorder %s194, %s196
      %p203 = scmp.eq.s32.totalorder %s39, 1
      %p204 = por %p202, %p203
      %p205 = scmp.ne.s32.totalorder %s196, %s197
      %p206 = scmp.eq.s32.totalorder %s39, 0
      %p207 = por %p205, %p206
      %p208 = scmp.ne.s32.totalorder %s196, %s197
      %p209 = scmp.eq.s32.totalorder %s40, 1
      %p210 = por %p208, %p209
      %p212 = scmp.ne.s32.totalorder %s197, %s211
      %p213 = scmp.eq.s32.totalorder %s40, 0
      %p214 = por %p212, %p213
      %s216 = sadd.s32 %s215, 1
      %p219 = scmp.eq.s32.totalorder %s34, 1
      %p220 = scmp.ne.s32.totalorder %s215, %s217
      %p221 = scmp.eq.s32.totalorder %s34, 0
      %p222 = por %p220, %p221
      %p223 = scmp.ne.s32.totalorder %s215, %s217
      %p224 = scmp.eq.s32.totalorder %s39, 1
      %p225 = por %p223, %p224
      %p226 = scmp.ne.s32.totalorder %s217, %s218
      %p227 = scmp.eq.s32.totalorder %s39, 0
      %p228 = por %p226, %p227
      %p229 = scmp.ne.s32.totalorder %s217, %s218
      %p230 = scmp.eq.s32.totalorder %s40, 1
      %p231 = por %p229, %p230
      %p233 = scmp.ne.s32.totalorder %s218, %s232
      %p234 = scmp.eq.s32.totalorder %s40, 0
      %p235 = por %p233, %p234
      %s237 = sadd.s32 %s236, 1
      %p240 = scmp.eq.s32.totalorder %s34, 1
      %p241 = scmp.ne.s32.totalorder %s236, %s238
      %p242 = scmp.eq.s32.totalorder %s34, 0
      %p243 = por %p241, %p242
      %p244 = scmp.ne.s32.totalorder %s236, %s238
      %p245 = scmp.eq.s32.totalorder %s39, 1
      %p246 = por %p244, %p245
      %p247 = scmp.ne.s32.totalorder %s238, %s239
      %p248 = scmp.eq.s32.totalorder %s39, 0
      %p249 = por %p247, %p248
      %p250 = scmp.ne.s32.totalorder %s238, %s239
      %p251 = scmp.eq.s32.totalorder %s40, 1
      %p252 = por %p250, %p251
      %p254 = scmp.ne.s32.totalorder %s239, %s253
      %p255 = scmp.eq.s32.totalorder %s40, 0
      %p256 = por %p254, %p255
      %s258 = sadd.s32 %s257, 1
      %p261 = scmp.eq.s32.totalorder %s34, 1
      %p262 = scmp.ne.s32.totalorder %s257, %s259
      %p263 = scmp.eq.s32.totalorder %s34, 0
      %p264 = por %p262, %p263
      %p265 = scmp.ne.s32.totalorder %s257, %s259
      %p266 = scmp.eq.s32.totalorder %s39, 1
      %p267 = por %p265, %p266
      %p268 = scmp.ne.s32.totalorder %s259, %s260
      %p269 = scmp.eq.s32.totalorder %s39, 0
      %p270 = por %p268, %p269
      %p271 = scmp.ne.s32.totalorder %s259, %s260
      %p272 = scmp.eq.s32.totalorder %s40, 1
      %p273 = por %p271, %p272
      %p275 = scmp.ne.s32.totalorder %s260, %s274
      %p276 = scmp.eq.s32.totalorder %s40, 0
      %p277 = por %p275, %p276
      %s279 = sadd.s32 %s278, 1
      %p282 = scmp.eq.s32.totalorder %s34, 1
      %p283 = scmp.ne.s32.totalorder %s278, %s280
      %p284 = scmp.eq.s32.totalorder %s34, 0
      %p285 = por %p283, %p284
      %p286 = scmp.ne.s32.totalorder %s278, %s280
      %p287 = scmp.eq.s32.totalorder %s39, 1
      %p288 = por %p286, %p287
      %p289 = scmp.ne.s32.totalorder %s280, %s281
      %p290 = scmp.eq.s32.totalorder %s39, 0
      %p291 = por %p289, %p290
      %p292 = scmp.ne.s32.totalorder %s280, %s281
      %p293 = scmp.eq.s32.totalorder %s40, 1
      %p294 = por %p292, %p293
      %p296 = scmp.ne.s32.totalorder %s281, %s295
      %p297 = scmp.eq.s32.totalorder %s40, 0
      %p298 = por %p296, %p297
      %s300 = sadd.s32 %s299, 1
      %p303 = scmp.eq.s32.totalorder %s34, 1
      %p304 = scmp.ne.s32.totalorder %s299, %s301
      %p305 = scmp.eq.s32.totalorder %s34, 0
      %p306 = por %p304, %p305
      %p307 = scmp.ne.s32.totalorder %s299, %s301
      %p308 = scmp.eq.s32.totalorder %s39, 1
      %p309 = por %p307, %p308
      %p310 = scmp.ne.s32.totalorder %s301, %s302
      %p311 = scmp.eq.s32.totalorder %s39, 0
      %p312 = por %p310, %p311
      %p313 = scmp.ne.s32.totalorder %s301, %s302
      %p314 = scmp.eq.s32.totalorder %s40, 1
      %p315 = por %p313, %p314
      %p317 = scmp.ne.s32.totalorder %s302, %s316
      %p318 = scmp.eq.s32.totalorder %s40, 0
      %p319 = por %p317, %p318
      %s320 = ssub.s32 %s34, %s41
      %p321 = scmp.eq.s32.totalorder %s320, 0
      %s323 = sadd.s32 %s322, 1
      %s324 = scalar_select %p321, %s322, %s323
      %p327 = pneg %p321
      %p328 = scmp.eq.s32.totalorder %s34, 1
      %p329 = por %p327, %p328
      %p330 = scmp.ne.s32.totalorder %s322, %s325
      %p331 = scmp.eq.s32.totalorder %s34, 0
      %p332 = por %p330, %p331
      %p333 = scmp.ne.s32.totalorder %s322, %s325
      %p334 = scmp.eq.s32.totalorder %s39, 1
      %p335 = por %p333, %p334
      %p336 = scmp.ne.s32.totalorder %s325, %s326
      %p337 = scmp.eq.s32.totalorder %s39, 0
      %p338 = por %p336, %p337
      %p339 = scmp.ne.s32.totalorder %s325, %s326
      %p340 = scmp.eq.s32.totalorder %s40, 1
      %p341 = por %p339, %p340
      %p343 = scmp.ne.s32.totalorder %s326, %s342
      %p344 = scmp.eq.s32.totalorder %s40, 0
      %p345 = por %p343, %p344
      %s346 = ssub.s32 %s34, %s41
      %p347 = scmp.eq.s32.totalorder %s346, 0
      %s349 = sadd.s32 %s348, 1
      %s350 = scalar_select %p347, %s348, %s349
      %p353 = pneg %p347
      %p354 = scmp.eq.s32.totalorder %s34, 1
      %p355 = por %p353, %p354
      %p356 = scmp.ne.s32.totalorder %s348, %s351
      %p357 = scmp.eq.s32.totalorder %s34, 0
      %p358 = por %p356, %p357
      %p359 = scmp.ne.s32.totalorder %s348, %s351
      %p360 = scmp.eq.s32.totalorder %s39, 1
      %p361 = por %p359, %p360
      %p362 = scmp.ne.s32.totalorder %s351, %s352
      %p363 = scmp.eq.s32.totalorder %s39, 0
      %p364 = por %p362, %p363
      %p365 = scmp.ne.s32.totalorder %s351, %s352
      %p366 = scmp.eq.s32.totalorder %s40, 1
      %p367 = por %p365, %p366
      %p369 = scmp.ne.s32.totalorder %s352, %s368
      %p370 = scmp.eq.s32.totalorder %s40, 0
      %p371 = por %p369, %p370
      %p372 = scmp.le.s32.totalorder 1, %s34
      %p373 = scmp.lt.s32.totalorder %s34, 3
      %p374 = pnand %p372, %p373
      %p375 = pneg %p374
      // Predicated region
      $region9: #{tpu_custom_call.1} parent=5 // pred_check
        _
      $region10: #{tpu_custom_call.1} parent=5 // pred_check_branch
        %377 = sbr.rel (%p374) target = $region12
      $region11: #{tpu_custom_call.1} parent=5 // pred_region
        %s378 = ssub.s32 %s34, 1
        // Predicated region
        $region13: #{tpu_custom_call.1} parent=11 // pred_check
          %p379 = pneg %p81
        $region14: #{tpu_custom_call.1} parent=11 // pred_check_branch
          %381 = sbr.rel (%p379) target = $region16
        $region15: #{tpu_custom_call.1} parent=11 // pred_region
          %383 = vsyncadd [#allocation6], 0
          %s384 = sshll.u32 %s1, 4
          %s385 = int_to_ptr.hbm [resolvable:$true] %s384
          %s386 = sshll.u32 [#allocation5], 4
          %s387 = int_to_ptr.vmem [resolvable:$true] %s386
          %392 = dma.hbm_to_vmem [thread:$0]  %s385, 2048, %s387, [#allocation6], 256, 256, 16
        $region16: #{tpu_custom_call.1} parent=11 // pred_fallthru
          _
        // Predicated region
        $region17: #{tpu_custom_call.1} parent=11 // pred_check
          %p393 = pneg %p102
        $region18: #{tpu_custom_call.1} parent=11 // pred_check_branch
          %395 = sbr.rel (%p393) target = $region20
        $region19: #{tpu_custom_call.1} parent=11 // pred_region
          %397 = vsyncadd [#allocation6], 0
          %s399 = sshll.u32 %s2, 4
          %s400 = int_to_ptr.hbm [resolvable:$true] %s399
          %s401 = sshll.u32 [#allocation7], 4
          %s402 = int_to_ptr.vmem [resolvable:$true] %s401
          %404 = dma.hbm_to_vmem [thread:$0]  %s400, 32, %s402, [#allocation6]
        $region20: #{tpu_custom_call.1} parent=11 // pred_fallthru
          _
        // Predicated region
        $region21: #{tpu_custom_call.1} parent=11 // pred_check
          %p405 = pneg %p123
        $region22: #{tpu_custom_call.1} parent=11 // pred_check_branch
          %407 = sbr.rel (%p405) target = $region24
        $region23: #{tpu_custom_call.1} parent=11 // pred_region
          _
        $region24: #{tpu_custom_call.1} parent=11 // pred_fallthru
          _
        // Predicated region
        $region25: #{tpu_custom_call.1} parent=11 // pred_check
          %p408 = pneg %p144
        $region26: #{tpu_custom_call.1} parent=11 // pred_check_branch
          %410 = sbr.rel (%p408) target = $region28
        $region27: #{tpu_custom_call.1} parent=11 // pred_region
          %412 = vsyncadd [#allocation9], 0
          %s414 = sshll.u32 %s4, 4
          %s415 = int_to_ptr.hbm [resolvable:$true] %s414
          %s416 = sshll.u32 [#allocation8], 4
          %s417 = int_to_ptr.vmem [resolvable:$true] %s416
          %419 = dma.hbm_to_vmem [thread:$0]  %s415, 32, %s417, [#allocation9]
        $region28: #{tpu_custom_call.1} parent=11 // pred_fallthru
          _
        // Predicated region
        $region29: #{tpu_custom_call.1} parent=11 // pred_check
          %p420 = pneg %p165
        $region30: #{tpu_custom_call.1} parent=11 // pred_check_branch
          %422 = sbr.rel (%p420) target = $region32
        $region31: #{tpu_custom_call.1} parent=11 // pred_region
          %424 = vsyncadd [#allocation9], 0
          %s425 = sshll.u32 %s5, 4
          %s426 = int_to_ptr.hbm [resolvable:$true] %s425
          %s427 = sshll.u32 [#allocation10], 4
          %s428 = int_to_ptr.vmem [resolvable:$true] %s427
          %433 = dma.hbm_to_vmem [thread:$0]  %s426, 4096, %s428, [#allocation9], 128, 128, 8
        $region32: #{tpu_custom_call.1} parent=11 // pred_fallthru
          _
        // Predicated region
        $region33: #{tpu_custom_call.1} parent=11 // pred_check
          %p434 = pneg %p186
        $region34: #{tpu_custom_call.1} parent=11 // pred_check_branch
          %436 = sbr.rel (%p434) target = $region36
        $region35: #{tpu_custom_call.1} parent=11 // pred_region
          %438 = vsyncadd [#allocation12], 0
          %s440 = sshll.u32 %s6, 4
          %s441 = int_to_ptr.hbm [resolvable:$true] %s440
          %s442 = sshll.u32 [#allocation11], 4
          %s443 = int_to_ptr.vmem [resolvable:$true] %s442
          %445 = dma.hbm_to_vmem [thread:$0]  %s441, 16, %s443, [#allocation12]
        $region36: #{tpu_custom_call.1} parent=11 // pred_fallthru
          _
        // Predicated region
        $region37: #{tpu_custom_call.1} parent=11 // pred_check
          %p446 = pneg %p207
        $region38: #{tpu_custom_call.1} parent=11 // pred_check_branch
          %448 = sbr.rel (%p446) target = $region40
        $region39: #{tpu_custom_call.1} parent=11 // pred_region
          %450 = vsyncadd [#allocation12], 0
          %s451 = sshll.u32 %s7, 4
          %s452 = int_to_ptr.hbm [resolvable:$true] %s451
          %s453 = sshll.u32 [#allocation13], 4
          %s454 = int_to_ptr.vmem [resolvable:$true] %s453
          %459 = dma.hbm_to_vmem [thread:$0]  %s452, 4096, %s454, [#allocation12], 256, 256, 16
        $region40: #{tpu_custom_call.1} parent=11 // pred_fallthru
          _
        // Predicated region
        $region41: #{tpu_custom_call.1} parent=11 // pred_check
          %p460 = pneg %p228
        $region42: #{tpu_custom_call.1} parent=11 // pred_check_branch
          %462 = sbr.rel (%p460) target = $region44
        $region43: #{tpu_custom_call.1} parent=11 // pred_region
          _
        $region44: #{tpu_custom_call.1} parent=11 // pred_fallthru
          _
        // Predicated region
        $region45: #{tpu_custom_call.1} parent=11 // pred_check
          %p463 = pneg %p249
        $region46: #{tpu_custom_call.1} parent=11 // pred_check_branch
          %465 = sbr.rel (%p463) target = $region48
        $region47: #{tpu_custom_call.1} parent=11 // pred_region
          _
        $region48: #{tpu_custom_call.1} parent=11 // pred_fallthru
          _
        // Predicated region
        $region49: #{tpu_custom_call.1} parent=11 // pred_check
          %p466 = pneg %p270
        $region50: #{tpu_custom_call.1} parent=11 // pred_check_branch
          %468 = sbr.rel (%p466) target = $region52
        $region51: #{tpu_custom_call.1} parent=11 // pred_region
          _
        $region52: #{tpu_custom_call.1} parent=11 // pred_fallthru
          _
        // Predicated region
        $region53: #{tpu_custom_call.1} parent=11 // pred_check
          %p469 = pneg %p291
        $region54: #{tpu_custom_call.1} parent=11 // pred_check_branch
          %471 = sbr.rel (%p469) target = $region56
        $region55: #{tpu_custom_call.1} parent=11 // pred_region
          %473 = vsyncadd [#allocation15], 0
          %s474 = sshll.u32 %s11, 4
          %s475 = int_to_ptr.hbm [resolvable:$true] %s474
          %s476 = sshll.u32 [#allocation14], 4
          %s477 = int_to_ptr.vmem [resolvable:$true] %s476
          %482 = dma.hbm_to_vmem [thread:$0]  %s475, 4096, %s477, [#allocation15], 128, 128, 8
        $region56: #{tpu_custom_call.1} parent=11 // pred_fallthru
          _
        // Predicated region
        $region57: #{tpu_custom_call.1} parent=11 // pred_check
          %p483 = pneg %p312
        $region58: #{tpu_custom_call.1} parent=11 // pred_check_branch
          %485 = sbr.rel (%p483) target = $region60
        $region59: #{tpu_custom_call.1} parent=11 // pred_region
          _
        $region60: #{tpu_custom_call.1} parent=11 // pred_fallthru
          _
      $region12: #{tpu_custom_call.1} parent=5 // pred_fallthru
        _
      %p486 = scmp.lt.s32.totalorder %s34, 2
      // Predicated region
      $region61: #{tpu_custom_call.1} parent=5 // pred_check
        %p487 = pneg %p486
      $region62: #{tpu_custom_call.1} parent=5 // pred_check_branch
        %489 = sbr.rel (%p487) target = $region64
      $region63: #{tpu_custom_call.1} parent=5 // pred_region
        // Predicated region
        $region65: #{tpu_custom_call.1} parent=63 // pred_check
          %p490 = pneg %p54
        $region66: #{tpu_custom_call.1} parent=63 // pred_check_branch
          %492 = sbr.rel (%p490) target = $region68
        $region67: #{tpu_custom_call.1} parent=63 // pred_region
          %s493 = sand.u32 %s44, 1
          %s494 = scalar_lea.sflag [#allocation3], %s493
          %s495 = sand.u32 %s44, 1
          %s496 = smul.addr %s495, 8
          %s497 = scalar_lea.vmem [#allocation2], %s496
          %499 = vsyncadd %s494, 0
          %s500 = smul.addr %s34, 8
          %s501 = scalar_lea.hbm %s0, %s500
          %s503 = sshll.u32 %s501, 4
          %s504 = int_to_ptr.hbm [resolvable:$true] %s503
          %s505 = sshll.u32 %s497, 4
          %s506 = int_to_ptr.vmem [resolvable:$true] %s505
          %508 = dma.hbm_to_vmem [thread:$0]  %s504, 128, %s506, %s494
        $region68: #{tpu_custom_call.1} parent=63 // pred_fallthru
          _
      $region64: #{tpu_custom_call.1} parent=5 // pred_fallthru
        _
      %p509 = scmp.le.s32.totalorder 1, %s34
      %p510 = scmp.lt.s32.totalorder %s34, 3
      %p511 = pnand %p509, %p510
      %p512 = pneg %p511
      // Predicated region
      $region69: #{tpu_custom_call.1} parent=5 // pred_check
        _
      $region70: #{tpu_custom_call.1} parent=5 // pred_check_branch
        %514 = sbr.rel (%p511) target = $region72
      $region71: #{tpu_custom_call.1} parent=5 // pred_region
        %s515 = ssub.s32 %s34, 1
        %s516 = sand.u32 %s47, 1
        %s517 = scalar_lea.sflag [#allocation3], %s516
        %s518 = sand.u32 %s47, 1
        %s519 = smul.addr %s518, 8
        %s520 = scalar_lea.vmem [#allocation2], %s519
        // Predicated region
        $region73: #{tpu_custom_call.1} parent=71 // pred_check
          %p521 = pneg %p60
        $region74: #{tpu_custom_call.1} parent=71 // pred_check_branch
          %523 = sbr.rel (%p521) target = $region76
        $region75: #{tpu_custom_call.1} parent=71 // pred_region
          %525 = dma.done %s517, 128
        $region76: #{tpu_custom_call.1} parent=71 // pred_fallthru
          _
        // Predicated region
        $region77: #{tpu_custom_call.1} parent=71 // pred_check
          %p526 = pneg %p81
        $region78: #{tpu_custom_call.1} parent=71 // pred_check_branch
          %528 = sbr.rel (%p526) target = $region80
        $region79: #{tpu_custom_call.1} parent=71 // pred_region
          %530 = dma.done [#allocation6], 2048
        $region80: #{tpu_custom_call.1} parent=71 // pred_fallthru
          _
        // Predicated region
        $region81: #{tpu_custom_call.1} parent=71 // pred_check
          %p531 = pneg %p102
        $region82: #{tpu_custom_call.1} parent=71 // pred_check_branch
          %533 = sbr.rel (%p531) target = $region84
        $region83: #{tpu_custom_call.1} parent=71 // pred_region
          %535 = dma.done [#allocation6], 32
        $region84: #{tpu_custom_call.1} parent=71 // pred_fallthru
          _
        // Predicated region
        $region85: #{tpu_custom_call.1} parent=71 // pred_check
          %p536 = pneg %p144
        $region86: #{tpu_custom_call.1} parent=71 // pred_check_branch
          %538 = sbr.rel (%p536) target = $region88
        $region87: #{tpu_custom_call.1} parent=71 // pred_region
          %540 = dma.done [#allocation9], 32
        $region88: #{tpu_custom_call.1} parent=71 // pred_fallthru
          _
        // Predicated region
        $region89: #{tpu_custom_call.1} parent=71 // pred_check
          %p541 = pneg %p165
        $region90: #{tpu_custom_call.1} parent=71 // pred_check_branch
          %543 = sbr.rel (%p541) target = $region92
        $region91: #{tpu_custom_call.1} parent=71 // pred_region
          %545 = dma.done [#allocation9], 4096
        $region92: #{tpu_custom_call.1} parent=71 // pred_fallthru
          _
        // Predicated region
        $region93: #{tpu_custom_call.1} parent=71 // pred_check
          %p546 = pneg %p186
        $region94: #{tpu_custom_call.1} parent=71 // pred_check_branch
          %548 = sbr.rel (%p546) target = $region96
        $region95: #{tpu_custom_call.1} parent=71 // pred_region
          %550 = dma.done [#allocation12], 16
        $region96: #{tpu_custom_call.1} parent=71 // pred_fallthru
          _
        // Predicated region
        $region97: #{tpu_custom_call.1} parent=71 // pred_check
          %p551 = pneg %p207
        $region98: #{tpu_custom_call.1} parent=71 // pred_check_branch
          %553 = sbr.rel (%p551) target = $region100
        $region99: #{tpu_custom_call.1} parent=71 // pred_region
          %555 = dma.done [#allocation12], 4096
        $region100: #{tpu_custom_call.1} parent=71 // pred_fallthru
          _
        // Predicated region
        $region101: #{tpu_custom_call.1} parent=71 // pred_check
          %p556 = pneg %p291
        $region102: #{tpu_custom_call.1} parent=71 // pred_check_branch
          %558 = sbr.rel (%p556) target = $region104
        $region103: #{tpu_custom_call.1} parent=71 // pred_region
          %560 = dma.done [#allocation15], 4096
        $region104: #{tpu_custom_call.1} parent=71 // pred_fallthru
          _
        %s561 = sand.u32 %s47, 1
        %s562 = scalar_lea.sflag [#allocation3], %s561
        %s563 = sand.u32 %s47, 1
        %s564 = smul.addr %s563, 8
        %s565 = scalar_lea.vmem [#allocation2], %s564
        %p566 = pneg %p60
        %p567 = pneg %p57
        %p568 = pneg %p81
        %p569 = pneg %p78
        %p570 = pneg %p102
        %p571 = pneg %p99
        %p572 = pneg %p123
        %p573 = pneg %p120
        %p574 = pneg %p144
        %p575 = pneg %p141
        %p576 = pneg %p165
        %p577 = pneg %p162
        %p578 = pneg %p186
        %p579 = pneg %p183
        %p580 = pneg %p207
        %p581 = pneg %p204
        %p582 = pneg %p228
        %p583 = pneg %p225
        %p584 = pneg %p249
        %p585 = pneg %p246
        %p586 = pneg %p270
        %p587 = pneg %p267
        %p588 = pneg %p291
        %p589 = pneg %p288
        %p590 = pneg %p312
        %p591 = pneg %p309
        %p592 = pneg %p338
        %p593 = pneg %p335
        %s594 = sand.u32 %s325, 1
        %s595 = scalar_lea.sflag [#allocation4], %s594
        %s596 = sand.u32 %s325, 1
        %s597 = smul.addr %s596, 8
        %s598 = scalar_lea.vmem [#allocation16], %s597
        %p599 = pneg %p364
        %p600 = pneg %p361
        %s601 = sand.u32 %s351, 1
        %s602 = scalar_lea.sflag [#allocation18], %s601
        %s603 = sand.u32 %s351, 1
        %s604 = smul.addr %s603, 8
        %s605 = scalar_lea.vmem [#allocation17], %s604
        %v606 = vld [vmem:[%s520] sm:$0xff]
        %v607 = vld [vmem:[#allocation5] sm:$0xff]
        %v608 = vld [vmem:[#allocation5 + $0x8] sm:$0xff]
        %v609 = vld [vmem:[#allocation5 + $0x10] sm:$0xff]
        %v610 = vld [vmem:[#allocation5 + $0x18] sm:$0xff]
        %v611 = vld [vmem:[#allocation5 + $0x20] sm:$0xff]
        %v612 = vld [vmem:[#allocation5 + $0x28] sm:$0xff]
        %v613 = vld [vmem:[#allocation5 + $0x30] sm:$0xff]
        %v614 = vld [vmem:[#allocation5 + $0x38] sm:$0xff]
        %v615 = vld [vmem:[#allocation5 + $0x40] sm:$0xff]
        %v616 = vld [vmem:[#allocation5 + $0x48] sm:$0xff]
        %v617 = vld [vmem:[#allocation5 + $0x50] sm:$0xff]
        %v618 = vld [vmem:[#allocation5 + $0x58] sm:$0xff]
        %v619 = vld [vmem:[#allocation5 + $0x60] sm:$0xff]
        %v620 = vld [vmem:[#allocation5 + $0x68] sm:$0xff]
        %v621 = vld [vmem:[#allocation5 + $0x70] sm:$0xff]
        %v622 = vld [vmem:[#allocation5 + $0x78] sm:$0xff]
        %v623 = vld [vmem:[#allocation7] sm:$0x3]
        %v625 = vperm.slane %v623, 0
        %v626 = vperm.slane %v623, 1
        %vm629 = vcmask 523264
        %v631 = vsel %vm629, %v606, 0
        %633 = vmatpush.msra.mxu0 0.0
        %634 = vmatpush.msra.mxu0 0.0
        %635 = vmatpush.msra.mxu0 0.0
        %636 = vmatpush.msra.mxu0 0.0
        %637 = vmatpush.msra.mxu0 0.0
        %638 = vmatpush.msra.mxu0 0.0
        %639 = vmatpush.msra.mxu0 0.0
        %640 = vmatpush.msra.mxu0 0.0
        %641 = vmatpush.msra.mxu0 %v621
        %642 = vmatpush.msra.mxu0 %v619
        %643 = vmatpush.msra.mxu0 %v617
        %644 = vmatpush.msra.mxu0 %v615
        %645 = vmatpush.msra.mxu0 %v613
        %646 = vmatpush.msra.mxu0 %v611
        %647 = vmatpush.msra.mxu0 %v609
        %648 = vmatpush.msra.mxu0 %v607
        %649 = vmatmul.f32.gmra.mxu0 %v631
        %v650 = vpop.f32.mrf.mxu0
        %v651 = vadd.f32 %v625, %v650
        %652 = vdwg.mxu0
        %653 = vmatpush.msra.mxu0 0.0
        %654 = vmatpush.msra.mxu0 0.0
        %655 = vmatpush.msra.mxu0 0.0
        %656 = vmatpush.msra.mxu0 0.0
        %657 = vmatpush.msra.mxu0 0.0
        %658 = vmatpush.msra.mxu0 0.0
        %659 = vmatpush.msra.mxu0 0.0
        %660 = vmatpush.msra.mxu0 0.0
        %661 = vmatpush.msra.mxu0 %v622
        %662 = vmatpush.msra.mxu0 %v620
        %663 = vmatpush.msra.mxu0 %v618
        %664 = vmatpush.msra.mxu0 %v616
        %665 = vmatpush.msra.mxu0 %v614
        %666 = vmatpush.msra.mxu0 %v612
        %667 = vmatpush.msra.mxu0 %v610
        %668 = vmatpush.msra.mxu0 %v608
        %669 = vmatmul.f32.gmra.mxu0 %v631
        %v670 = vpop.f32.mrf.mxu0
        %v671 = vadd.f32 %v626, %v670
        %672 = vdwg.mxu0
        %v673 = vld [vmem:[%s3] sm:$0x3]
        %v674 = vld [vmem:[#allocation8] sm:$0x3]
        %v675 = vadd.f32 %v651, %v671
        %676 = vadd.xlane.f32.xlu0 %v675
        %v677 = vpop.xlane.xlu0 %676
        %v678 = vrcp.pop 256.0
        %v679 = vmul.f32 256.0, %v678
        %v680 = vsub.f32 1.0, %v679
        %v681 = vmul.f32 %v678, %v680
        %v682 = vadd.f32 %v678, %v681
        %vm683 = vweird.f32 %v678
        %v684 = vsel %vm683, %v678, %v682
        %v685 = vmul.f32 %v677, %v684
        %v686 = vsub.f32 %v651, %v685
        %v687 = vsub.f32 %v671, %v685
        %v688 = vmul.f32 %v686, %v686
        %v689 = vmul.f32 %v687, %v687
        %v690 = vadd.f32 %v688, %v689
        %691 = vadd.xlane.f32.xlu0 %v690
        %v692 = vpop.xlane.xlu0 %691
        %v693 = vmul.f32 %v692, %v684
        %v694 = vadd.f32 %v693, 1e-05
        %v695 = vrsqrt.pop %v694
        %v696 = vmul.f32 %v695, %v694
        %v697 = vmul.f32 %v696, %v695
        %v698 = vmul.f32 0.5, %v697
        %v699 = vsub.f32 1.5, %v698
        %v700 = vmul.f32 %v695, %v699
        %vm701 = vweird.f32 %v694
        %vm702 = vweird.f32 %v695
        %vm703 = vmor %vm701, %vm702
        %v704 = vsel %vm703, %v695, %v700
        %v705 = vmul.f32 %v686, %v704
        %v706 = vmul.f32 %v687, %v704
        %v708 = vperm.slane %v673, 0
        %v709 = vperm.slane %v673, 1
        %v712 = vmul.f32 %v705, %v708
        %v713 = vmul.f32 %v706, %v709
        %v715 = vperm.slane %v674, 0
        %v716 = vperm.slane %v674, 1
        %v719 = vadd.f32 %v712, %v715
        %v720 = vadd.f32 %v713, %v716
        %v721 = vmax.f32 %v719, 0.0
        %v722 = vmax.f32 %v720, 0.0
        %v723 = vld [vmem:[#allocation10] sm:$0xff]
        %v724 = vld [vmem:[#allocation10 + $0x8] sm:$0xff]
        %v725 = vld [vmem:[#allocation10 + $0x10] sm:$0xff]
        %v726 = vld [vmem:[#allocation10 + $0x18] sm:$0xff]
        %v727 = vld [vmem:[#allocation10 + $0x20] sm:$0xff]
        %v728 = vld [vmem:[#allocation10 + $0x28] sm:$0xff]
        %v729 = vld [vmem:[#allocation10 + $0x30] sm:$0xff]
        %v730 = vld [vmem:[#allocation10 + $0x38] sm:$0xff]
        %v731 = vld [vmem:[#allocation10 + $0x40] sm:$0xff]
        %v732 = vld [vmem:[#allocation10 + $0x48] sm:$0xff]
        %v733 = vld [vmem:[#allocation10 + $0x50] sm:$0xff]
        %v734 = vld [vmem:[#allocation10 + $0x58] sm:$0xff]
        %v735 = vld [vmem:[#allocation10 + $0x60] sm:$0xff]
        %v736 = vld [vmem:[#allocation10 + $0x68] sm:$0xff]
        %v737 = vld [vmem:[#allocation10 + $0x70] sm:$0xff]
        %v738 = vld [vmem:[#allocation10 + $0x78] sm:$0xff]
        %v739 = vld [vmem:[#allocation10 + $0x80] sm:$0xff]
        %v740 = vld [vmem:[#allocation10 + $0x88] sm:$0xff]
        %v741 = vld [vmem:[#allocation10 + $0x90] sm:$0xff]
        %v742 = vld [vmem:[#allocation10 + $0x98] sm:$0xff]
        %v743 = vld [vmem:[#allocation10 + $0xa0] sm:$0xff]
        %v744 = vld [vmem:[#allocation10 + $0xa8] sm:$0xff]
        %v745 = vld [vmem:[#allocation10 + $0xb0] sm:$0xff]
        %v746 = vld [vmem:[#allocation10 + $0xb8] sm:$0xff]
        %v747 = vld [vmem:[#allocation10 + $0xc0] sm:$0xff]
        %v748 = vld [vmem:[#allocation10 + $0xc8] sm:$0xff]
        %v749 = vld [vmem:[#allocation10 + $0xd0] sm:$0xff]
        %v750 = vld [vmem:[#allocation10 + $0xd8] sm:$0xff]
        %v751 = vld [vmem:[#allocation10 + $0xe0] sm:$0xff]
        %v752 = vld [vmem:[#allocation10 + $0xe8] sm:$0xff]
        %v753 = vld [vmem:[#allocation10 + $0xf0] sm:$0xff]
        %v754 = vld [vmem:[#allocation10 + $0xf8] sm:$0xff]
        %v755 = vld [vmem:[#allocation11] sm:$0x1]
        %v757 = vperm.slane %v755, 0
        %759 = vmatpush.msra.mxu0 %v738
        %760 = vmatpush.msra.mxu0 %v737
        %761 = vmatpush.msra.mxu0 %v736
        %762 = vmatpush.msra.mxu0 %v735
        %763 = vmatpush.msra.mxu0 %v734
        %764 = vmatpush.msra.mxu0 %v733
        %765 = vmatpush.msra.mxu0 %v732
        %766 = vmatpush.msra.mxu0 %v731
        %767 = vmatpush.msra.mxu0 %v730
        %768 = vmatpush.msra.mxu0 %v729
        %769 = vmatpush.msra.mxu0 %v728
        %770 = vmatpush.msra.mxu0 %v727
        %771 = vmatpush.msra.mxu0 %v726
        %772 = vmatpush.msra.mxu0 %v725
        %773 = vmatpush.msra.mxu0 %v724
        %774 = vmatpush.msra.mxu0 %v723
        %775 = vmatmul.f32.gmra.mxu0 %v721
        %v776 = vpop.f32.mrf.mxu0
        %v777 = vadd.f32 %v757, %v776
        %778 = vdwg.mxu0
        %779 = vmatpush.msra.mxu0 %v754
        %780 = vmatpush.msra.mxu0 %v753
        %781 = vmatpush.msra.mxu0 %v752
        %782 = vmatpush.msra.mxu0 %v751
        %783 = vmatpush.msra.mxu0 %v750
        %784 = vmatpush.msra.mxu0 %v749
        %785 = vmatpush.msra.mxu0 %v748
        %786 = vmatpush.msra.mxu0 %v747
        %787 = vmatpush.msra.mxu0 %v746
        %788 = vmatpush.msra.mxu0 %v745
        %789 = vmatpush.msra.mxu0 %v744
        %790 = vmatpush.msra.mxu0 %v743
        %791 = vmatpush.msra.mxu0 %v742
        %792 = vmatpush.msra.mxu0 %v741
        %793 = vmatpush.msra.mxu0 %v740
        %794 = vmatpush.msra.mxu0 %v739
        %795 = vmatmul.f32.gmra.mxu0 %v722
        %v796 = vpop.f32.mrf.mxu0
        %v797 = vadd.f32 %v777, %v796
        %798 = vdwg.mxu0
        %799 = vst [vmem:[%s598] sm:$0xff] %v797
        %v800 = vld [vmem:[#allocation13] sm:$0xff]
        %v801 = vld [vmem:[#allocation13 + $0x8] sm:$0xff]
        %v802 = vld [vmem:[#allocation13 + $0x10] sm:$0xff]
        %v803 = vld [vmem:[#allocation13 + $0x18] sm:$0xff]
        %v804 = vld [vmem:[#allocation13 + $0x20] sm:$0xff]
        %v805 = vld [vmem:[#allocation13 + $0x28] sm:$0xff]
        %v806 = vld [vmem:[#allocation13 + $0x30] sm:$0xff]
        %v807 = vld [vmem:[#allocation13 + $0x38] sm:$0xff]
        %v808 = vld [vmem:[#allocation13 + $0x40] sm:$0xff]
        %v809 = vld [vmem:[#allocation13 + $0x48] sm:$0xff]
        %v810 = vld [vmem:[#allocation13 + $0x50] sm:$0xff]
        %v811 = vld [vmem:[#allocation13 + $0x58] sm:$0xff]
        %v812 = vld [vmem:[#allocation13 + $0x60] sm:$0xff]
        %v813 = vld [vmem:[#allocation13 + $0x68] sm:$0xff]
        %v814 = vld [vmem:[#allocation13 + $0x70] sm:$0xff]
        %v815 = vld [vmem:[#allocation13 + $0x78] sm:$0xff]
        %v816 = vld [vmem:[#allocation13 + $0x80] sm:$0xff]
        %v817 = vld [vmem:[#allocation13 + $0x88] sm:$0xff]
        %v818 = vld [vmem:[#allocation13 + $0x90] sm:$0xff]
        %v819 = vld [vmem:[#allocation13 + $0x98] sm:$0xff]
        %v820 = vld [vmem:[#allocation13 + $0xa0] sm:$0xff]
        %v821 = vld [vmem:[#allocation13 + $0xa8] sm:$0xff]
        %v822 = vld [vmem:[#allocation13 + $0xb0] sm:$0xff]
        %v823 = vld [vmem:[#allocation13 + $0xb8] sm:$0xff]
        %v824 = vld [vmem:[#allocation13 + $0xc0] sm:$0xff]
        %v825 = vld [vmem:[#allocation13 + $0xc8] sm:$0xff]
        %v826 = vld [vmem:[#allocation13 + $0xd0] sm:$0xff]
        %v827 = vld [vmem:[#allocation13 + $0xd8] sm:$0xff]
        %v828 = vld [vmem:[#allocation13 + $0xe0] sm:$0xff]
        %v829 = vld [vmem:[#allocation13 + $0xe8] sm:$0xff]
        %v830 = vld [vmem:[#allocation13 + $0xf0] sm:$0xff]
        %v831 = vld [vmem:[#allocation13 + $0xf8] sm:$0xff]
        %v832 = vld [vmem:[%s8] sm:$0x3]
        %v834 = vperm.slane %v832, 0
        %v835 = vperm.slane %v832, 1
        %838 = vmatpush.msra.mxu0 %v830
        %839 = vmatpush.msra.mxu0 %v828
        %840 = vmatpush.msra.mxu0 %v826
        %841 = vmatpush.msra.mxu0 %v824
        %842 = vmatpush.msra.mxu0 %v822
        %843 = vmatpush.msra.mxu0 %v820
        %844 = vmatpush.msra.mxu0 %v818
        %845 = vmatpush.msra.mxu0 %v816
        %846 = vmatpush.msra.mxu0 %v814
        %847 = vmatpush.msra.mxu0 %v812
        %848 = vmatpush.msra.mxu0 %v810
        %849 = vmatpush.msra.mxu0 %v808
        %850 = vmatpush.msra.mxu0 %v806
        %851 = vmatpush.msra.mxu0 %v804
        %852 = vmatpush.msra.mxu0 %v802
        %853 = vmatpush.msra.mxu0 %v800
        %854 = vmatmul.f32.gmra.mxu0 %v797
        %v855 = vpop.f32.mrf.mxu0
        %v856 = vadd.f32 %v834, %v855
        %857 = vdwg.mxu0
        %858 = vmatpush.msra.mxu0 %v831
        %859 = vmatpush.msra.mxu0 %v829
        %860 = vmatpush.msra.mxu0 %v827
        %861 = vmatpush.msra.mxu0 %v825
        %862 = vmatpush.msra.mxu0 %v823
        %863 = vmatpush.msra.mxu0 %v821
        %864 = vmatpush.msra.mxu0 %v819
        %865 = vmatpush.msra.mxu0 %v817
        %866 = vmatpush.msra.mxu0 %v815
        %867 = vmatpush.msra.mxu0 %v813
        %868 = vmatpush.msra.mxu0 %v811
        %869 = vmatpush.msra.mxu0 %v809
        %870 = vmatpush.msra.mxu0 %v807
        %871 = vmatpush.msra.mxu0 %v805
        %872 = vmatpush.msra.mxu0 %v803
        %873 = vmatpush.msra.mxu0 %v801
        %874 = vmatmul.f32.gmra.mxu0 %v797
        %v875 = vpop.f32.mrf.mxu0
        %v876 = vadd.f32 %v835, %v875
        %877 = vdwg.mxu0
        %v878 = vld [vmem:[%s9] sm:$0x3]
        %v879 = vld [vmem:[%s10] sm:$0x3]
        %v880 = vadd.f32 %v856, %v876
        %881 = vadd.xlane.f32.xlu0 %v880
        %v882 = vpop.xlane.xlu0 %881
        %v883 = vmul.f32 %v882, %v684
        %v884 = vsub.f32 %v856, %v883
        %v885 = vsub.f32 %v876, %v883
        %v886 = vmul.f32 %v884, %v884
        %v887 = vmul.f32 %v885, %v885
        %v888 = vadd.f32 %v886, %v887
        %889 = vadd.xlane.f32.xlu0 %v888
        %v890 = vpop.xlane.xlu0 %889
        %v891 = vmul.f32 %v890, %v684
        %v892 = vadd.f32 %v891, 1e-05
        %v893 = vrsqrt.pop %v892
        %v894 = vmul.f32 %v893, %v892
        %v895 = vmul.f32 %v894, %v893
        %v896 = vmul.f32 0.5, %v895
        %v897 = vsub.f32 1.5, %v896
        %v898 = vmul.f32 %v893, %v897
        %vm899 = vweird.f32 %v892
        %vm900 = vweird.f32 %v893
        %vm901 = vmor %vm899, %vm900
        %v902 = vsel %vm901, %v893, %v898
        %v903 = vmul.f32 %v884, %v902
        %v904 = vmul.f32 %v885, %v902
        %v906 = vperm.slane %v878, 0
        %v907 = vperm.slane %v878, 1
        %v910 = vmul.f32 %v903, %v906
        %v911 = vmul.f32 %v904, %v907
        %v913 = vperm.slane %v879, 0
        %v914 = vperm.slane %v879, 1
        %v917 = vadd.f32 %v910, %v913
        %v918 = vadd.f32 %v911, %v914
        %v919 = vmax.f32 %v917, 0.0
        %v920 = vmax.f32 %v918, 0.0
        %v921 = vld [vmem:[#allocation14] sm:$0xff]
        %v922 = vld [vmem:[#allocation14 + $0x8] sm:$0xff]
        %v923 = vld [vmem:[#allocation14 + $0x10] sm:$0xff]
        %v924 = vld [vmem:[#allocation14 + $0x18] sm:$0xff]
        %v925 = vld [vmem:[#allocation14 + $0x20] sm:$0xff]
        %v926 = vld [vmem:[#allocation14 + $0x28] sm:$0xff]
        %v927 = vld [vmem:[#allocation14 + $0x30] sm:$0xff]
        %v928 = vld [vmem:[#allocation14 + $0x38] sm:$0xff]
        %v929 = vld [vmem:[#allocation14 + $0x40] sm:$0xff]
        %v930 = vld [vmem:[#allocation14 + $0x48] sm:$0xff]
        %v931 = vld [vmem:[#allocation14 + $0x50] sm:$0xff]
        %v932 = vld [vmem:[#allocation14 + $0x58] sm:$0xff]
        %v933 = vld [vmem:[#allocation14 + $0x60] sm:$0xff]
        %v934 = vld [vmem:[#allocation14 + $0x68] sm:$0xff]
        %v935 = vld [vmem:[#allocation14 + $0x70] sm:$0xff]
        %v936 = vld [vmem:[#allocation14 + $0x78] sm:$0xff]
        %v937 = vld [vmem:[#allocation14 + $0x80] sm:$0xff]
        %v938 = vld [vmem:[#allocation14 + $0x88] sm:$0xff]
        %v939 = vld [vmem:[#allocation14 + $0x90] sm:$0xff]
        %v940 = vld [vmem:[#allocation14 + $0x98] sm:$0xff]
        %v941 = vld [vmem:[#allocation14 + $0xa0] sm:$0xff]
        %v942 = vld [vmem:[#allocation14 + $0xa8] sm:$0xff]
        %v943 = vld [vmem:[#allocation14 + $0xb0] sm:$0xff]
        %v944 = vld [vmem:[#allocation14 + $0xb8] sm:$0xff]
        %v945 = vld [vmem:[#allocation14 + $0xc0] sm:$0xff]
        %v946 = vld [vmem:[#allocation14 + $0xc8] sm:$0xff]
        %v947 = vld [vmem:[#allocation14 + $0xd0] sm:$0xff]
        %v948 = vld [vmem:[#allocation14 + $0xd8] sm:$0xff]
        %v949 = vld [vmem:[#allocation14 + $0xe0] sm:$0xff]
        %v950 = vld [vmem:[#allocation14 + $0xe8] sm:$0xff]
        %v951 = vld [vmem:[#allocation14 + $0xf0] sm:$0xff]
        %v952 = vld [vmem:[#allocation14 + $0xf8] sm:$0xff]
        %v953 = vld [vmem:[%s12] sm:$0x1]
        %v955 = vperm.slane %v953, 0
        %957 = vmatpush.msra.mxu0 %v936
        %958 = vmatpush.msra.mxu0 %v935
        %959 = vmatpush.msra.mxu0 %v934
        %960 = vmatpush.msra.mxu0 %v933
        %961 = vmatpush.msra.mxu0 %v932
        %962 = vmatpush.msra.mxu0 %v931
        %963 = vmatpush.msra.mxu0 %v930
        %964 = vmatpush.msra.mxu0 %v929
        %965 = vmatpush.msra.mxu0 %v928
        %966 = vmatpush.msra.mxu0 %v927
        %967 = vmatpush.msra.mxu0 %v926
        %968 = vmatpush.msra.mxu0 %v925
        %969 = vmatpush.msra.mxu0 %v924
        %970 = vmatpush.msra.mxu0 %v923
        %971 = vmatpush.msra.mxu0 %v922
        %972 = vmatpush.msra.mxu0 %v921
        %973 = vmatmul.f32.gmra.mxu0 %v919
        %v974 = vpop.f32.mrf.mxu0
        %v975 = vadd.f32 %v955, %v974
        %976 = vdwg.mxu0
        %977 = vmatpush.msra.mxu0 %v952
        %978 = vmatpush.msra.mxu0 %v951
        %979 = vmatpush.msra.mxu0 %v950
        %980 = vmatpush.msra.mxu0 %v949
        %981 = vmatpush.msra.mxu0 %v948
        %982 = vmatpush.msra.mxu0 %v947
        %983 = vmatpush.msra.mxu0 %v946
        %984 = vmatpush.msra.mxu0 %v945
        %985 = vmatpush.msra.mxu0 %v944
        %986 = vmatpush.msra.mxu0 %v943
        %987 = vmatpush.msra.mxu0 %v942
        %988 = vmatpush.msra.mxu0 %v941
        %989 = vmatpush.msra.mxu0 %v940
        %990 = vmatpush.msra.mxu0 %v939
        %991 = vmatpush.msra.mxu0 %v938
        %992 = vmatpush.msra.mxu0 %v937
        %993 = vmatmul.f32.gmra.mxu0 %v920
        %v994 = vpop.f32.mrf.mxu0
        %v995 = vadd.f32 %v975, %v994
        %996 = vdwg.mxu0
        %997 = vst [vmem:[%s605] sm:$0xff] %v995
        %s998 = sand.u32 %s325, 1
        %s999 = scalar_lea.sflag [#allocation4], %s998
        %s1000 = sand.u32 %s325, 1
        %s1001 = smul.addr %s1000, 8
        %s1002 = scalar_lea.vmem [#allocation16], %s1001
        %s1003 = sand.u32 %s351, 1
        %s1004 = scalar_lea.sflag [#allocation18], %s1003
        %s1005 = sand.u32 %s351, 1
        %s1006 = smul.addr %s1005, 8
        %s1007 = scalar_lea.vmem [#allocation17], %s1006
        // Predicated region
        $region105: #{tpu_custom_call.1} parent=71 // pred_check
          %p1008 = pneg %p335
        $region106: #{tpu_custom_call.1} parent=71 // pred_check_branch
          %1010 = sbr.rel (%p1008) target = $region108
        $region107: #{tpu_custom_call.1} parent=71 // pred_region
          %1012 = vsyncadd %s999, 0
          %s1013 = smul.addr %s39, 8
          %s1014 = scalar_lea.hbm %s13, %s1013
          %s1016 = sshll.u32 %s1002, 4
          %s1017 = int_to_ptr.vmem [resolvable:$true] %s1016
          %s1018 = sshll.u32 %s1014, 4
          %s1019 = int_to_ptr.hbm [resolvable:$true] %s1018
          %1021 = dma.vmem_to_hbm [thread:$0]  %s1017, 128, %s1019, %s999
        $region108: #{tpu_custom_call.1} parent=71 // pred_fallthru
          _
        // Predicated region
        $region109: #{tpu_custom_call.1} parent=71 // pred_check
          %p1022 = pneg %p361
        $region110: #{tpu_custom_call.1} parent=71 // pred_check_branch
          %1024 = sbr.rel (%p1022) target = $region112
        $region111: #{tpu_custom_call.1} parent=71 // pred_region
          %1026 = vsyncadd %s1004, 0
          %s1027 = smul.addr %s39, 8
          %s1028 = scalar_lea.hbm %s14, %s1027
          %s1030 = sshll.u32 %s1007, 4
          %s1031 = int_to_ptr.vmem [resolvable:$true] %s1030
          %s1032 = sshll.u32 %s1028, 4
          %s1033 = int_to_ptr.hbm [resolvable:$true] %s1032
          %1035 = dma.vmem_to_hbm [thread:$0]  %s1031, 128, %s1033, %s1004
        $region112: #{tpu_custom_call.1} parent=71 // pred_fallthru
          _
      $region72: #{tpu_custom_call.1} parent=5 // pred_fallthru
        _
      %p1036 = scmp.le.s32.totalorder 2, %s34
      // Predicated region
      $region113: #{tpu_custom_call.1} parent=5 // pred_check
        %p1037 = pneg %p1036
      $region114: #{tpu_custom_call.1} parent=5 // pred_check_branch
        %1039 = sbr.rel (%p1037) target = $region116
      $region115: #{tpu_custom_call.1} parent=5 // pred_region
        %s1040 = ssub.s32 %s34, 2
        // Predicated region
        $region117: #{tpu_custom_call.1} parent=115 // pred_check
          %p1041 = pneg %p341
        $region118: #{tpu_custom_call.1} parent=115 // pred_check_branch
          %1043 = sbr.rel (%p1041) target = $region120
        $region119: #{tpu_custom_call.1} parent=115 // pred_region
          %s1044 = sand.u32 %s326, 1
          %s1045 = scalar_lea.sflag [#allocation4], %s1044
          %s1046 = sand.u32 %s326, 1
          %s1047 = smul.addr %s1046, 8
          %s1048 = scalar_lea.vmem [#allocation16], %s1047
          %1050 = dma.done %s1045, 128
        $region120: #{tpu_custom_call.1} parent=115 // pred_fallthru
          _
        // Predicated region
        $region121: #{tpu_custom_call.1} parent=115 // pred_check
          %p1051 = pneg %p367
        $region122: #{tpu_custom_call.1} parent=115 // pred_check_branch
          %1053 = sbr.rel (%p1051) target = $region124
        $region123: #{tpu_custom_call.1} parent=115 // pred_region
          %s1054 = sand.u32 %s352, 1
          %s1055 = scalar_lea.sflag [#allocation18], %s1054
          %s1056 = sand.u32 %s352, 1
          %s1057 = smul.addr %s1056, 8
          %s1058 = scalar_lea.vmem [#allocation17], %s1057
          %1060 = dma.done %s1055, 128
        $region124: #{tpu_custom_call.1} parent=115 // pred_fallthru
          _
      $region116: #{tpu_custom_call.1} parent=5 // pred_fallthru
        _
    $region6: #{tpu_custom_call.1} parent=1 // loop_footer
      %s38 = sadd.s32 1, %s34
    $region7: #{tpu_custom_call.1} parent=1 // loop_footer_branch
      %33 = sbr.rel target = $region3
    $region8: #{tpu_custom_call.1} parent=1 // loop_exit
      _
    %1061 = vsyncpa [#allocation3], 1
    %s1062 = scalar_lea.sflag [#allocation3], 1
    %1063 = vsyncpa %s1062, 1
    %1064 = vsyncpa [#allocation6], 1
    %1065 = vsyncpa [#allocation9], 1
    %1066 = vsyncpa [#allocation12], 1
    %1067 = vsyncpa [#allocation15], 1
    %1068 = vsyncpa [#allocation4], 1
    %s1069 = scalar_lea.sflag [#allocation4], 1
    %1070 = vsyncpa %s1069, 1
    %1071 = vsyncpa [#allocation18], 1
    %s1072 = scalar_lea.sflag [#allocation18], 1
    %1073 = vsyncpa %s1072, 1

</llo_original>
